<compile_context>
chip_gen: v5e
topology: v5e:2x2
jax: 0.10.0
libtpu: 0.0.40
codegen_flags: <defaults>
</compile_context>

<pallas_src>
import jax
import jax.numpy as jnp
from jax.experimental import pallas as pl
from jax.experimental.pallas import tpu as pltpu


NEG_SLOPE = 0.01  # PyTorch nn.LeakyReLU default negative_slope


def _leaky_relu(x):
    return jnp.where(x > 0, x, NEG_SLOPE * x)


def mlp_kernel(x_ref, w1_ref, b1_ref, w2_ref, b2_ref, w3_ref, b3_ref,
               w4row_ref, b4_ref, o_ref):
    # Entire MLP fused: 3 MXU matmuls + VPU LeakyReLU; the final (H3 -> 1)
    # projection is a VPU multiply + lane reduction (avoids a 1-lane matmul).
    x = x_ref[...]

    h = jnp.dot(x, w1_ref[...], preferred_element_type=jnp.float32) + b1_ref[...]
    h = _leaky_relu(h)

    h = jnp.dot(h, w2_ref[...], preferred_element_type=jnp.float32) + b2_ref[...]
    h = _leaky_relu(h)

    h = jnp.dot(h, w3_ref[...], preferred_element_type=jnp.float32) + b3_ref[...]
    h = _leaky_relu(h)

    logits = jnp.sum(h * w4row_ref[...], axis=-1, keepdims=True) + b4_ref[...]
    o_ref[...] = jax.nn.sigmoid(logits)


def _round_up(n, m):
    return ((n + m - 1) // m) * m


def _pad2(a, rows, cols):
    r, c = a.shape
    if r == rows and c == cols:
        return a
    return jnp.pad(a, ((0, rows - r), (0, cols - c)))


def _pick_batch_tile(B):
    # Small batches: one kernel invocation, no per-step pipeline overhead.
    if B <= 512:
        return B
    # Large batches: fill the MXU (256 rows on v6e/v7x, >=128 on v5e).
    for bt in (512, 256, 128, 64, 32, 16, 8):
        if B % bt == 0:
            return bt
    return B  # odd batch sizes: single big tile


def mlp_forward(x, params):
    """params = (w1, b1, w2, b2, w3, b3, w4, b4); wi: (in, out), bi: (1, out)."""
    x = x.astype(jnp.float32)  # matches `inputs_.float()` in the module
    B, D = x.shape
    w1, b1, w2, b2, w3, b3, w4, b4 = params

    H1, H2, H3 = w1.shape[1], w2.shape[1], w3.shape[1]
    OUT = w4.shape[1]  # 1

    # Zero-pad hidden feature dims to lane-dense (multiples of 128) shapes.
    # Padded lanes stay exactly zero through bias-add / LeakyReLU / reduce.
    H1p, H2p, H3p = (_round_up(H1, 128), _round_up(H2, 128), _round_up(H3, 128))
    w1p, b1p = _pad2(w1, D, H1p), _pad2(b1, 1, H1p)
    w2p, b2p = _pad2(w2, H1p, H2p), _pad2(b2, 1, H2p)
    w3p, b3p = _pad2(w3, H2p, H3p), _pad2(b3, 1, H3p)
    w4row = _pad2(w4.T, 1, H3p)          # (1, H3p) row for the VPU reduction
    b4 = b4.reshape(1, OUT)

    bt = _pick_batch_tile(B)
    grid_steps = B // bt

    full = lambda shape: pl.BlockSpec(shape, lambda i: (0, 0))

    kwargs = {}
    if grid_steps > 1:
        # Only shard the batch axis across cores when there is real work per
        # step (v7x megacore); for a single step this is pure overhead.
        kwargs["compiler_params"] = pltpu.CompilerParams(
            dimension_semantics=("parallel",))

    return pl.pallas_call(
        mlp_kernel,
        out_shape=jax.ShapeDtypeStruct((B, OUT), jnp.float32),
        grid=(grid_steps,),
        in_specs=[
            pl.BlockSpec((bt, D), lambda i: (i, 0)),   # x tile
            full((D, H1p)), full((1, H1p)),
            full((H1p, H2p)), full((1, H2p)),
            full((H2p, H3p)), full((1, H3p)),
            full((1, H3p)),                            # w4 as a row
            full((1, OUT)),                            # b4
        ],
        out_specs=pl.BlockSpec((bt, OUT), lambda i: (i, 0)),
        **kwargs,
    )(x, w1p, b1p, w2p, b2p, w3p, b3p, w4row, b4)


def init_params(key, inputs):
    """Deterministic init matching the PyTorch module's layer shapes.
    nn.Linear weight (out, in) is stored transposed as (in, out) here."""
    dims = [(inputs, inputs), (inputs, 150), (150, 150), (150, 1)]
    params = []
    for fan_in, fan_out in dims:
        kw, kb, key = jax.random.split(key, 3)
        bound = 1.0 / jnp.sqrt(fan_in)
        w = jax.random.uniform(kw, (fan_in, fan_out), jnp.float32, -bound, bound)
        b = jax.random.uniform(kb, (1, fan_out), jnp.float32, -bound, bound)
        params += [w, b]
    return tuple(params)


def reference_forward(x, params):
    x = x.astype(jnp.float32)
    w1, b1, w2, b2, w3, b3, w4, b4 = params
    h = _leaky_relu(x @ w1 + b1)
    h = _leaky_relu(h @ w2 + b2)
    h = _leaky_relu(h @ w3 + b3)
    return jax.nn.sigmoid(h @ w4 + b4)


if __name__ == "__main__":
    key = jax.random.PRNGKey(0)
    kx, kp = jax.random.split(key)

    INPUTS = 32   # length of input vector
    BATCH = 16

    x = jax.random.normal(kx, (BATCH, INPUTS), dtype=jnp.float32)
    params = init_params(kp, INPUTS)

    out = mlp_forward(x, params)
    out = jax.block_until_ready(out)

    ref = reference_forward(x, params)
    assert out.shape == (BATCH, 1)
    assert jnp.allclose(out, ref, atol=1e-5, rtol=1e-5)

    print("KERNEL_OK")
</pallas_src>

<mosaic_0001>
module attributes {stable_mosaic.version = 11 : i64} {
  func.func @mlp_kernel(%arg0: i32, %arg1: memref<16x32xf32, #tpu.memory_space<vmem>>, %arg2: memref<32x128xf32, #tpu.memory_space<vmem>>, %arg3: memref<1x128xf32, #tpu.memory_space<vmem>>, %arg4: memref<128x256xf32, #tpu.memory_space<vmem>>, %arg5: memref<1x256xf32, #tpu.memory_space<vmem>>, %arg6: memref<256x256xf32, #tpu.memory_space<vmem>>, %arg7: memref<1x256xf32, #tpu.memory_space<vmem>>, %arg8: memref<1x256xf32, #tpu.memory_space<vmem>>, %arg9: memref<1x1xf32, #tpu.memory_space<vmem>>, %arg10: memref<16x1xf32, #tpu.memory_space<vmem>>) attributes {dimension_semantics = [#tpu.dimension_semantics<arbitrary>], iteration_bounds = array<i64: 1>, scalar_prefetch = 0 : i64, scratch_operands = 0 : i64, tpu.core_type = #tpu.core_type<tc>, window_params = [{transform_indices = @transform_0, window_bounds = array<i64: 16, 32>}, {pipeline_mode = #tpu.pipeline_mode<synchronous>, transform_indices = @transform_1, window_bounds = array<i64: 32, 128>}, {pipeline_mode = #tpu.pipeline_mode<synchronous>, transform_indices = @transform_2, window_bounds = array<i64: 1, 128>}, {pipeline_mode = #tpu.pipeline_mode<synchronous>, transform_indices = @transform_3, window_bounds = array<i64: 128, 256>}, {pipeline_mode = #tpu.pipeline_mode<synchronous>, transform_indices = @transform_4, window_bounds = array<i64: 1, 256>}, {pipeline_mode = #tpu.pipeline_mode<synchronous>, transform_indices = @transform_5, window_bounds = array<i64: 256, 256>}, {pipeline_mode = #tpu.pipeline_mode<synchronous>, transform_indices = @transform_6, window_bounds = array<i64: 1, 256>}, {pipeline_mode = #tpu.pipeline_mode<synchronous>, transform_indices = @transform_7, window_bounds = array<i64: 1, 256>}, {pipeline_mode = #tpu.pipeline_mode<synchronous>, transform_indices = @transform_8, window_bounds = array<i64: 1, 1>}, {transform_indices = @transform_9, window_bounds = array<i64: 16, 1>}]} {
    %c0 = arith.constant 0 : index
    %c0_0 = arith.constant 0 : index
    %0 = vector.load %arg1[%c0, %c0_0] : memref<16x32xf32, #tpu.memory_space<vmem>>, vector<16x32xf32>
    %c0_1 = arith.constant 0 : index
    %c0_2 = arith.constant 0 : index
    %1 = vector.load %arg2[%c0_1, %c0_2] : memref<32x128xf32, #tpu.memory_space<vmem>>, vector<32x128xf32>
    %cst = arith.constant dense<0.000000e+00> : vector<16x128xf32>
    %2 = tpu.matmul %0, %1, %cst {dimension_numbers = #tpu.dot_dimension_numbers<[1], [0], [0], [1], [0, 0, 1, 1], [], []>} : vector<16x32xf32>, vector<32x128xf32>, vector<16x128xf32> -> vector<16x128xf32>
    %c0_3 = arith.constant 0 : index
    %c0_4 = arith.constant 0 : index
    %3 = vector.load %arg3[%c0_3, %c0_4] : memref<1x128xf32, #tpu.memory_space<vmem>>, vector<1x128xf32>
    %4 = vector.broadcast %3 : vector<1x128xf32> to vector<16x128xf32>
    %5 = arith.addf %2, %4 : vector<16x128xf32>
    %cst_5 = arith.constant 0.000000e+00 : f32
    %6 = vector.broadcast %cst_5 : f32 to vector<16x128xf32>
    %7 = arith.cmpf ogt, %5, %6 : vector<16x128xf32>
    %cst_6 = arith.constant 0.00999999977 : f32
    %8 = vector.broadcast %cst_6 : f32 to vector<16x128xf32>
    %9 = arith.mulf %8, %5 : vector<16x128xf32>
    %10 = arith.select %7, %5, %9 : vector<16x128xi1>, vector<16x128xf32>
    %c0_7 = arith.constant 0 : index
    %c0_8 = arith.constant 0 : index
    %11 = vector.load %arg4[%c0_7, %c0_8] : memref<128x256xf32, #tpu.memory_space<vmem>>, vector<128x256xf32>
    %cst_9 = arith.constant dense<0.000000e+00> : vector<16x256xf32>
    %12 = tpu.matmul %10, %11, %cst_9 {dimension_numbers = #tpu.dot_dimension_numbers<[1], [0], [0], [1], [0, 0, 1, 1], [], []>} : vector<16x128xf32>, vector<128x256xf32>, vector<16x256xf32> -> vector<16x256xf32>
    %c0_10 = arith.constant 0 : index
    %c0_11 = arith.constant 0 : index
    %13 = vector.load %arg5[%c0_10, %c0_11] : memref<1x256xf32, #tpu.memory_space<vmem>>, vector<1x256xf32>
    %14 = vector.broadcast %13 : vector<1x256xf32> to vector<16x256xf32>
    %15 = arith.addf %12, %14 : vector<16x256xf32>
    %cst_12 = arith.constant 0.000000e+00 : f32
    %16 = vector.broadcast %cst_12 : f32 to vector<16x256xf32>
    %17 = arith.cmpf ogt, %15, %16 : vector<16x256xf32>
    %cst_13 = arith.constant 0.00999999977 : f32
    %18 = vector.broadcast %cst_13 : f32 to vector<16x256xf32>
    %19 = arith.mulf %18, %15 : vector<16x256xf32>
    %20 = arith.select %17, %15, %19 : vector<16x256xi1>, vector<16x256xf32>
    %c0_14 = arith.constant 0 : index
    %c0_15 = arith.constant 0 : index
    %21 = vector.load %arg6[%c0_14, %c0_15] : memref<256x256xf32, #tpu.memory_space<vmem>>, vector<256x256xf32>
    %cst_16 = arith.constant dense<0.000000e+00> : vector<16x256xf32>
    %22 = tpu.matmul %20, %21, %cst_16 {dimension_numbers = #tpu.dot_dimension_numbers<[1], [0], [0], [1], [0, 0, 1, 1], [], []>} : vector<16x256xf32>, vector<256x256xf32>, vector<16x256xf32> -> vector<16x256xf32>
    %c0_17 = arith.constant 0 : index
    %c0_18 = arith.constant 0 : index
    %23 = vector.load %arg7[%c0_17, %c0_18] : memref<1x256xf32, #tpu.memory_space<vmem>>, vector<1x256xf32>
    %24 = vector.broadcast %23 : vector<1x256xf32> to vector<16x256xf32>
    %25 = arith.addf %22, %24 : vector<16x256xf32>
    %cst_19 = arith.constant 0.000000e+00 : f32
    %26 = vector.broadcast %cst_19 : f32 to vector<16x256xf32>
    %27 = arith.cmpf ogt, %25, %26 : vector<16x256xf32>
    %cst_20 = arith.constant 0.00999999977 : f32
    %28 = vector.broadcast %cst_20 : f32 to vector<16x256xf32>
    %29 = arith.mulf %28, %25 : vector<16x256xf32>
    %30 = arith.select %27, %25, %29 : vector<16x256xi1>, vector<16x256xf32>
    %c0_21 = arith.constant 0 : index
    %c0_22 = arith.constant 0 : index
    %31 = vector.load %arg8[%c0_21, %c0_22] : memref<1x256xf32, #tpu.memory_space<vmem>>, vector<1x256xf32>
    %32 = vector.broadcast %31 : vector<1x256xf32> to vector<16x256xf32>
    %33 = arith.mulf %30, %32 : vector<16x256xf32>
    %cst_23 = arith.constant dense<0.000000e+00> : vector<16xf32>
    %34 = vector.multi_reduction <add>, %33, %cst_23 [1] : vector<16x256xf32> to vector<16xf32>
    %35 = vector.shape_cast %34 : vector<16xf32> to vector<16x1xf32>
    %c0_24 = arith.constant 0 : index
    %c0_25 = arith.constant 0 : index
    %36 = vector.load %arg9[%c0_24, %c0_25] : memref<1x1xf32, #tpu.memory_space<vmem>>, vector<1x1xf32>
    %37 = vector.broadcast %36 : vector<1x1xf32> to vector<16x1xf32>
    %38 = arith.addf %35, %37 : vector<16x1xf32>
    %39 = arith.negf %38 : vector<16x1xf32>
    %40 = math.exp %39 : vector<16x1xf32>
    %cst_26 = arith.constant 1.000000e+00 : f32
    %41 = vector.broadcast %cst_26 : f32 to vector<16x1xf32>
    %42 = arith.addf %41, %40 : vector<16x1xf32>
    %43 = arith.divf %41, %42 : vector<16x1xf32>
    %c0_27 = arith.constant 0 : index
    %c0_28 = arith.constant 0 : index
    %44 = vector.load %arg10[%c0_27, %c0_28] : memref<16x1xf32, #tpu.memory_space<vmem>>, vector<16x1xf32>
    tpu.vector_store %arg10[%c0_27, %c0_28], %43 {strides = array<i32>} : memref<16x1xf32, #tpu.memory_space<vmem>>, vector<16x1xf32>,
    return
  }
  func.func @transform_0(%arg0: i32) -> (i32, i32) {
    %c0_i32 = arith.constant 0 : i32
    %c0_i32_0 = arith.constant 0 : i32
    return %arg0, %c0_i32 : i32, i32
  }
  func.func @transform_1(%arg0: i32) -> (i32, i32) {
    %c0_i32 = arith.constant 0 : i32
    %c0_i32_0 = arith.constant 0 : i32
    %c0_i32_1 = arith.constant 0 : i32
    return %c0_i32, %c0_i32_0 : i32, i32
  }
  func.func @transform_2(%arg0: i32) -> (i32, i32) {
    %c0_i32 = arith.constant 0 : i32
    %c0_i32_0 = arith.constant 0 : i32
    %c0_i32_1 = arith.constant 0 : i32
    return %c0_i32, %c0_i32_0 : i32, i32
  }
  func.func @transform_3(%arg0: i32) -> (i32, i32) {
    %c0_i32 = arith.constant 0 : i32
    %c0_i32_0 = arith.constant 0 : i32
    %c0_i32_1 = arith.constant 0 : i32
    return %c0_i32, %c0_i32_0 : i32, i32
  }
  func.func @transform_4(%arg0: i32) -> (i32, i32) {
    %c0_i32 = arith.constant 0 : i32
    %c0_i32_0 = arith.constant 0 : i32
    %c0_i32_1 = arith.constant 0 : i32
    return %c0_i32, %c0_i32_0 : i32, i32
  }
  func.func @transform_5(%arg0: i32) -> (i32, i32) {
    %c0_i32 = arith.constant 0 : i32
    %c0_i32_0 = arith.constant 0 : i32
    %c0_i32_1 = arith.constant 0 : i32
    return %c0_i32, %c0_i32_0 : i32, i32
  }
  func.func @transform_6(%arg0: i32) -> (i32, i32) {
    %c0_i32 = arith.constant 0 : i32
    %c0_i32_0 = arith.constant 0 : i32
    %c0_i32_1 = arith.constant 0 : i32
    return %c0_i32, %c0_i32_0 : i32, i32
  }
  func.func @transform_7(%arg0: i32) -> (i32, i32) {
    %c0_i32 = arith.constant 0 : i32
    %c0_i32_0 = arith.constant 0 : i32
    %c0_i32_1 = arith.constant 0 : i32
    return %c0_i32, %c0_i32_0 : i32, i32
  }
  func.func @transform_8(%arg0: i32) -> (i32, i32) {
    %c0_i32 = arith.constant 0 : i32
    %c0_i32_0 = arith.constant 0 : i32
    %c0_i32_1 = arith.constant 0 : i32
    return %c0_i32, %c0_i32_0 : i32, i32
  }
  func.func @transform_9(%arg0: i32) -> (i32, i32) {
    %c0_i32 = arith.constant 0 : i32
    %c0_i32_0 = arith.constant 0 : i32
    return %arg0, %c0_i32 : i32, i32
  }
}

</mosaic_0001>

<llo_original>
// kernel: tpu_custom_call.1
$region0: #{tpu_custom_call.1}
  #allocation0 [shape = 'u32[]', space=smem, size = 0x4, offset = 0x4, fixed_abs, tag = 'smem constant byte address 0x4 - core index']
  #allocation1 [shape = 'u32[72,128]{1,0:T(1,128)}', space=vmem, size = 0x9000, scoped, tag = 'internal scratch']
  #allocation2 [shape = 'f32[1,1]{1,0:T(1,128)S(1)}', space=vmem, size = 0x200, scoped, tag = 'scoped memory for tpu_custom_call.1']
  %s0 = inlined_call_operand.hbm [shape: f32[16,32], index: 0, kind: input, shape index: {}]
  %s1 = inlined_call_operand.hbm [shape: f32[32,128], index: 1, kind: input, shape index: {}]
  %s2 = inlined_call_operand.hbm [shape: f32[1,128], index: 2, kind: input, shape index: {}]
  %s3 = inlined_call_operand.hbm [shape: f32[128,256], index: 3, kind: input, shape index: {}]
  %s4 = inlined_call_operand.vmem [shape: f32[1,256], index: 4, kind: input, shape index: {}]
  %s5 = inlined_call_operand.hbm [shape: f32[256,256], index: 5, kind: input, shape index: {}]
  %s6 = inlined_call_operand.vmem [shape: f32[1,256], index: 6, kind: input, shape index: {}]
  %s7 = inlined_call_operand.vmem [shape: f32[1,256], index: 7, kind: input, shape index: {}]
  %s8 = inlined_call_operand.<no memory space> [shape: f32[1,1], index: 8, kind: input, shape index: {}]
  %s9 = inlined_call_operand.vmem [shape: f32[16,1], index: 9, kind: output, shape index: {}]
  %s10 = sld [smem:[#allocation0]]
  $region66: #{tpu_custom_call.1} parent=0
    _
  %s12 = ssub.s32 1, %s10
  %s13 = scalar_select 0, %s12, %s10
  %v14 = vstv %s8
  %15 = vst [vmem:[#allocation2] sm:$0x1] %v14
  $region1: #{tpu_custom_call.1} parent=0
    #allocation3 [shape = 'u8[8192]{0}', space=vmem, size = 0x2000, scoped, tag = 'input window, operand 0, single buffered']
    #allocation4 [shape = 's32[1]{0}', space=sflag, size = 0x4, scoped, tag = 'scoped memory for tpu_custom_call.1']
    #allocation5 [shape = 'u8[16384]{0}', space=vmem, size = 0x4000, scoped, tag = 'input window, operand 1, single buffered']
    #allocation6 [shape = 's32[1]{0}', space=sflag, size = 0x4, scoped, tag = 'scoped memory for tpu_custom_call.1']
    #allocation7 [shape = 'u8[512]{0}', space=vmem, size = 0x400, scoped, tag = 'input window, operand 2, single buffered']
    #allocation8 [shape = 'u8[131072]{0}', space=vmem, size = 0x20000, scoped, tag = 'input window, operand 3, single buffered']
    #allocation9 [shape = 's32[1]{0}', space=sflag, size = 0x4, scoped, tag = 'scoped memory for tpu_custom_call.1']
    #allocation10 [shape = 'u8[262144]{0}', space=vmem, size = 0x40000, scoped, tag = 'input window, operand 5, single buffered']
    %16 = vsyncpa [#allocation4], 0
    %17 = vsyncpa [#allocation6], 0
    %18 = vsyncpa [#allocation9], 0
    // Predicated region
    $region2: #{tpu_custom_call.1} parent=1 // pred_check
      _
    $region3: #{tpu_custom_call.1} parent=1 // pred_check_branch
      %20 = sbr.rel (0) target = $region5
    $region4: #{tpu_custom_call.1} parent=1 // pred_region
      %22 = vsyncadd [#allocation4], 0
      %s23 = sshll.u32 %s0, 4
      %s24 = int_to_ptr.hbm [resolvable:$true] %s23
      %s25 = sshll.u32 [#allocation3], 4
      %s26 = int_to_ptr.vmem [resolvable:$true] %s25
      %31 = dma.hbm_to_vmem [thread:$0]  %s24, 256, %s26, [#allocation4], 128, 128, 8
    $region5: #{tpu_custom_call.1} parent=1 // pred_fallthru
      _
    // Predicated region
    $region6: #{tpu_custom_call.1} parent=1 // pred_check
      _
    $region7: #{tpu_custom_call.1} parent=1 // pred_check_branch
      %33 = sbr.rel (0) target = $region9
    $region8: #{tpu_custom_call.1} parent=1 // pred_region
      %35 = vsyncadd [#allocation6], 0
      %s36 = sshll.u32 %s1, 4
      %s37 = int_to_ptr.hbm [resolvable:$true] %s36
      %s38 = sshll.u32 [#allocation5], 4
      %s39 = int_to_ptr.vmem [resolvable:$true] %s38
      %44 = dma.hbm_to_vmem [thread:$0]  %s37, 512, %s39, [#allocation6], 128, 128, 8
    $region9: #{tpu_custom_call.1} parent=1 // pred_fallthru
      _
    // Predicated region
    $region10: #{tpu_custom_call.1} parent=1 // pred_check
      _
    $region11: #{tpu_custom_call.1} parent=1 // pred_check_branch
      %46 = sbr.rel (0) target = $region13
    $region12: #{tpu_custom_call.1} parent=1 // pred_region
      %48 = vsyncadd [#allocation6], 0
      %s50 = sshll.u32 %s2, 4
      %s51 = int_to_ptr.hbm [resolvable:$true] %s50
      %s52 = sshll.u32 [#allocation7], 4
      %s53 = int_to_ptr.vmem [resolvable:$true] %s52
      %55 = dma.hbm_to_vmem [thread:$0]  %s51, 16, %s53, [#allocation6]
    $region13: #{tpu_custom_call.1} parent=1 // pred_fallthru
      _
    // Predicated region
    $region14: #{tpu_custom_call.1} parent=1 // pred_check
      _
    $region15: #{tpu_custom_call.1} parent=1 // pred_check_branch
      %57 = sbr.rel (0) target = $region17
    $region16: #{tpu_custom_call.1} parent=1 // pred_region
      %59 = vsyncadd [#allocation9], 0
      %s60 = sshll.u32 %s3, 4
      %s61 = int_to_ptr.hbm [resolvable:$true] %s60
      %s62 = sshll.u32 [#allocation8], 4
      %s63 = int_to_ptr.vmem [resolvable:$true] %s62
      %68 = dma.hbm_to_vmem [thread:$0]  %s61, 4096, %s63, [#allocation9], 256, 256, 16
    $region17: #{tpu_custom_call.1} parent=1 // pred_fallthru
      _
    // Predicated region
    $region18: #{tpu_custom_call.1} parent=1 // pred_check
      _
    $region19: #{tpu_custom_call.1} parent=1 // pred_check_branch
      %70 = sbr.rel (0) target = $region21
    $region20: #{tpu_custom_call.1} parent=1 // pred_region
      _
    $region21: #{tpu_custom_call.1} parent=1 // pred_fallthru
      _
    // Predicated region
    $region22: #{tpu_custom_call.1} parent=1 // pred_check
      _
    $region23: #{tpu_custom_call.1} parent=1 // pred_check_branch
      %72 = sbr.rel (0) target = $region25
    $region24: #{tpu_custom_call.1} parent=1 // pred_region
      %74 = vsyncadd [#allocation9], 0
      %s75 = sshll.u32 %s5, 4
      %s76 = int_to_ptr.hbm [resolvable:$true] %s75
      %s77 = sshll.u32 [#allocation10], 4
      %s78 = int_to_ptr.vmem [resolvable:$true] %s77
      %83 = dma.hbm_to_vmem [thread:$0]  %s76, 8192, %s78, [#allocation9], 256, 256, 16
    $region25: #{tpu_custom_call.1} parent=1 // pred_fallthru
      _
    // Predicated region
    $region26: #{tpu_custom_call.1} parent=1 // pred_check
      _
    $region27: #{tpu_custom_call.1} parent=1 // pred_check_branch
      %85 = sbr.rel (0) target = $region29
    $region28: #{tpu_custom_call.1} parent=1 // pred_region
      _
    $region29: #{tpu_custom_call.1} parent=1 // pred_fallthru
      _
    // Predicated region
    $region30: #{tpu_custom_call.1} parent=1 // pred_check
      _
    $region31: #{tpu_custom_call.1} parent=1 // pred_check_branch
      %87 = sbr.rel (0) target = $region33
    $region32: #{tpu_custom_call.1} parent=1 // pred_region
      _
    $region33: #{tpu_custom_call.1} parent=1 // pred_fallthru
      _
    // Predicated region
    $region34: #{tpu_custom_call.1} parent=1 // pred_check
      _
    $region35: #{tpu_custom_call.1} parent=1 // pred_check_branch
      %89 = sbr.rel (0) target = $region37
    $region36: #{tpu_custom_call.1} parent=1 // pred_region
      _
    $region37: #{tpu_custom_call.1} parent=1 // pred_fallthru
      _
    // Predicated region
    $region38: #{tpu_custom_call.1} parent=1 // pred_check
      _
    $region39: #{tpu_custom_call.1} parent=1 // pred_check_branch
      %91 = sbr.rel (0) target = $region41
    $region40: #{tpu_custom_call.1} parent=1 // pred_region
      %93 = dma.done [#allocation4], 256
    $region41: #{tpu_custom_call.1} parent=1 // pred_fallthru
      _
    // Predicated region
    $region42: #{tpu_custom_call.1} parent=1 // pred_check
      _
    $region43: #{tpu_custom_call.1} parent=1 // pred_check_branch
      %95 = sbr.rel (0) target = $region45
    $region44: #{tpu_custom_call.1} parent=1 // pred_region
      %97 = dma.done [#allocation6], 512
    $region45: #{tpu_custom_call.1} parent=1 // pred_fallthru
      _
    // Predicated region
    $region46: #{tpu_custom_call.1} parent=1 // pred_check
      _
    $region47: #{tpu_custom_call.1} parent=1 // pred_check_branch
      %99 = sbr.rel (0) target = $region49
    $region48: #{tpu_custom_call.1} parent=1 // pred_region
      %101 = dma.done [#allocation6], 16
    $region49: #{tpu_custom_call.1} parent=1 // pred_fallthru
      _
    // Predicated region
    $region50: #{tpu_custom_call.1} parent=1 // pred_check
      _
    $region51: #{tpu_custom_call.1} parent=1 // pred_check_branch
      %103 = sbr.rel (0) target = $region53
    $region52: #{tpu_custom_call.1} parent=1 // pred_region
      %105 = dma.done [#allocation9], 4096
    $region53: #{tpu_custom_call.1} parent=1 // pred_fallthru
      _
    // Predicated region
    $region54: #{tpu_custom_call.1} parent=1 // pred_check
      _
    $region55: #{tpu_custom_call.1} parent=1 // pred_check_branch
      %107 = sbr.rel (0) target = $region57
    $region56: #{tpu_custom_call.1} parent=1 // pred_region
      %109 = dma.done [#allocation9], 8192
    $region57: #{tpu_custom_call.1} parent=1 // pred_fallthru
      _
    %v110 = vld [vmem:[#allocation3] sm:$0xff]
    %v111 = vld [vmem:[#allocation3 + $0x8] sm:$0xff]
    %v112 = vld [vmem:[#allocation5] sm:$0xff]
    %v113 = vld [vmem:[#allocation5 + $0x8] sm:$0xff]
    %v114 = vld [vmem:[#allocation5 + $0x10] sm:$0xff]
    %v115 = vld [vmem:[#allocation5 + $0x18] sm:$0xff]
    %v116 = vld [vmem:[#allocation7] sm:$0x1]
    %v118 = vperm.slane %v116, 0
    %vm120 = vcmask 261120
    %v122 = vsel %vm120, %v110, 0
    %v125 = vsel %vm120, %v111, 0
    %127 = vmatpush.msra.mxu0 0.0
    %128 = vmatpush.msra.mxu0 0.0
    %129 = vmatpush.msra.mxu0 0.0
    %130 = vmatpush.msra.mxu0 0.0
    %131 = vmatpush.msra.mxu0 0.0
    %132 = vmatpush.msra.mxu0 0.0
    %133 = vmatpush.msra.mxu0 0.0
    %134 = vmatpush.msra.mxu0 0.0
    %135 = vmatpush.msra.mxu0 0.0
    %136 = vmatpush.msra.mxu0 0.0
    %137 = vmatpush.msra.mxu0 0.0
    %138 = vmatpush.msra.mxu0 0.0
    %139 = vmatpush.msra.mxu0 %v115
    %140 = vmatpush.msra.mxu0 %v114
    %141 = vmatpush.msra.mxu0 %v113
    %142 = vmatpush.msra.mxu0 %v112
    %143 = vmatmul.f32.gmra.mxu0 %v122
    %v144 = vpop.f32.mrf.mxu0
    %v145 = vadd.f32 %v118, %v144
    %146 = vmatmul.f32.gmra.mxu0 %v125
    %v147 = vpop.f32.mrf.mxu0
    %v148 = vadd.f32 %v118, %v147
    %149 = vdwg.mxu0
    %vm150 = vcmp.gt.f32.partialorder %v145, 0.0
    %vm151 = vcmp.gt.f32.partialorder %v148, 0.0
    %v152 = vmul.f32 %v145, 0.01
    %v153 = vmul.f32 %v148, 0.01
    %v154 = vsel %vm150, %v145, %v152
    %v155 = vsel %vm151, %v148, %v153
    %v156 = vld [vmem:[#allocation8] sm:$0xff]
    %v157 = vld [vmem:[#allocation8 + $0x8] sm:$0xff]
    %v158 = vld [vmem:[#allocation8 + $0x10] sm:$0xff]
    %v159 = vld [vmem:[#allocation8 + $0x18] sm:$0xff]
    %v160 = vld [vmem:[#allocation8 + $0x20] sm:$0xff]
    %v161 = vld [vmem:[#allocation8 + $0x28] sm:$0xff]
    %v162 = vld [vmem:[#allocation8 + $0x30] sm:$0xff]
    %v163 = vld [vmem:[#allocation8 + $0x38] sm:$0xff]
    %v164 = vld [vmem:[#allocation8 + $0x40] sm:$0xff]
    %v165 = vld [vmem:[#allocation8 + $0x48] sm:$0xff]
    %v166 = vld [vmem:[#allocation8 + $0x50] sm:$0xff]
    %v167 = vld [vmem:[#allocation8 + $0x58] sm:$0xff]
    %v168 = vld [vmem:[#allocation8 + $0x60] sm:$0xff]
    %v169 = vld [vmem:[#allocation8 + $0x68] sm:$0xff]
    %v170 = vld [vmem:[#allocation8 + $0x70] sm:$0xff]
    %v171 = vld [vmem:[#allocation8 + $0x78] sm:$0xff]
    %v172 = vld [vmem:[#allocation8 + $0x80] sm:$0xff]
    %v173 = vld [vmem:[#allocation8 + $0x88] sm:$0xff]
    %v174 = vld [vmem:[#allocation8 + $0x90] sm:$0xff]
    %v175 = vld [vmem:[#allocation8 + $0x98] sm:$0xff]
    %v176 = vld [vmem:[#allocation8 + $0xa0] sm:$0xff]
    %v177 = vld [vmem:[#allocation8 + $0xa8] sm:$0xff]
    %v178 = vld [vmem:[#allocation8 + $0xb0] sm:$0xff]
    %v179 = vld [vmem:[#allocation8 + $0xb8] sm:$0xff]
    %v180 = vld [vmem:[#allocation8 + $0xc0] sm:$0xff]
    %v181 = vld [vmem:[#allocation8 + $0xc8] sm:$0xff]
    %v182 = vld [vmem:[#allocation8 + $0xd0] sm:$0xff]
    %v183 = vld [vmem:[#allocation8 + $0xd8] sm:$0xff]
    %v184 = vld [vmem:[#allocation8 + $0xe0] sm:$0xff]
    %v185 = vld [vmem:[#allocation8 + $0xe8] sm:$0xff]
    %v186 = vld [vmem:[#allocation8 + $0xf0] sm:$0xff]
    %v187 = vld [vmem:[#allocation8 + $0xf8] sm:$0xff]
    %v188 = vld [vmem:[%s4] sm:$0x3]
    %v190 = vperm.slane %v188, 0
    %v191 = vperm.slane %v188, 1
    %194 = vmatpush.msra.mxu0 %v186
    %195 = vmatpush.msra.mxu0 %v184
    %196 = vmatpush.msra.mxu0 %v182
    %197 = vmatpush.msra.mxu0 %v180
    %198 = vmatpush.msra.mxu0 %v178
    %199 = vmatpush.msra.mxu0 %v176
    %200 = vmatpush.msra.mxu0 %v174
    %201 = vmatpush.msra.mxu0 %v172
    %202 = vmatpush.msra.mxu0 %v170
    %203 = vmatpush.msra.mxu0 %v168
    %204 = vmatpush.msra.mxu0 %v166
    %205 = vmatpush.msra.mxu0 %v164
    %206 = vmatpush.msra.mxu0 %v162
    %207 = vmatpush.msra.mxu0 %v160
    %208 = vmatpush.msra.mxu0 %v158
    %209 = vmatpush.msra.mxu0 %v156
    %210 = vmatmul.f32.gmra.mxu0 %v154
    %v211 = vpop.f32.mrf.mxu0
    %v212 = vadd.f32 %v190, %v211
    %213 = vmatmul.f32.gmra.mxu0 %v155
    %v214 = vpop.f32.mrf.mxu0
    %v215 = vadd.f32 %v190, %v214
    %216 = vdwg.mxu0
    %217 = vmatpush.msra.mxu0 %v187
    %218 = vmatpush.msra.mxu0 %v185
    %219 = vmatpush.msra.mxu0 %v183
    %220 = vmatpush.msra.mxu0 %v181
    %221 = vmatpush.msra.mxu0 %v179
    %222 = vmatpush.msra.mxu0 %v177
    %223 = vmatpush.msra.mxu0 %v175
    %224 = vmatpush.msra.mxu0 %v173
    %225 = vmatpush.msra.mxu0 %v171
    %226 = vmatpush.msra.mxu0 %v169
    %227 = vmatpush.msra.mxu0 %v167
    %228 = vmatpush.msra.mxu0 %v165
    %229 = vmatpush.msra.mxu0 %v163
    %230 = vmatpush.msra.mxu0 %v161
    %231 = vmatpush.msra.mxu0 %v159
    %232 = vmatpush.msra.mxu0 %v157
    %233 = vmatmul.f32.gmra.mxu0 %v154
    %v234 = vpop.f32.mrf.mxu0
    %v235 = vadd.f32 %v191, %v234
    %236 = vmatmul.f32.gmra.mxu0 %v155
    %v237 = vpop.f32.mrf.mxu0
    %v238 = vadd.f32 %v191, %v237
    %239 = vdwg.mxu0
    %vm240 = vcmp.gt.f32.partialorder %v212, 0.0
    %vm241 = vcmp.gt.f32.partialorder %v235, 0.0
    %vm242 = vcmp.gt.f32.partialorder %v215, 0.0
    %vm243 = vcmp.gt.f32.partialorder %v238, 0.0
    %v244 = vmul.f32 %v212, 0.01
    %v245 = vmul.f32 %v235, 0.01
    %v246 = vmul.f32 %v215, 0.01
    %v247 = vmul.f32 %v238, 0.01
    %v248 = vsel %vm240, %v212, %v244
    %v249 = vsel %vm241, %v235, %v245
    %v250 = vsel %vm242, %v215, %v246
    %v251 = vsel %vm243, %v238, %v247
    %v252 = vld [vmem:[#allocation10] sm:$0xff]
    %v253 = vld [vmem:[#allocation10 + $0x8] sm:$0xff]
    %v254 = vld [vmem:[#allocation10 + $0x10] sm:$0xff]
    %v255 = vld [vmem:[#allocation10 + $0x18] sm:$0xff]
    %v256 = vld [vmem:[#allocation10 + $0x20] sm:$0xff]
    %v257 = vld [vmem:[#allocation10 + $0x28] sm:$0xff]
    %v258 = vld [vmem:[#allocation10 + $0x30] sm:$0xff]
    %v259 = vld [vmem:[#allocation10 + $0x38] sm:$0xff]
    %v260 = vld [vmem:[#allocation10 + $0x40] sm:$0xff]
    %v261 = vld [vmem:[#allocation10 + $0x48] sm:$0xff]
    %v262 = vld [vmem:[#allocation10 + $0x50] sm:$0xff]
    %v263 = vld [vmem:[#allocation10 + $0x58] sm:$0xff]
    %v264 = vld [vmem:[#allocation10 + $0x60] sm:$0xff]
    %v265 = vld [vmem:[#allocation10 + $0x68] sm:$0xff]
    %v266 = vld [vmem:[#allocation10 + $0x70] sm:$0xff]
    %v267 = vld [vmem:[#allocation10 + $0x78] sm:$0xff]
    %v268 = vld [vmem:[#allocation10 + $0x80] sm:$0xff]
    %v269 = vld [vmem:[#allocation10 + $0x88] sm:$0xff]
    %v270 = vld [vmem:[#allocation10 + $0x90] sm:$0xff]
    %v271 = vld [vmem:[#allocation10 + $0x98] sm:$0xff]
    %v272 = vld [vmem:[#allocation10 + $0xa0] sm:$0xff]
    %v273 = vld [vmem:[#allocation10 + $0xa8] sm:$0xff]
    %v274 = vld [vmem:[#allocation10 + $0xb0] sm:$0xff]
    %v275 = vld [vmem:[#allocation10 + $0xb8] sm:$0xff]
    %v276 = vld [vmem:[#allocation10 + $0xc0] sm:$0xff]
    %v277 = vld [vmem:[#allocation10 + $0xc8] sm:$0xff]
    %v278 = vld [vmem:[#allocation10 + $0xd0] sm:$0xff]
    %v279 = vld [vmem:[#allocation10 + $0xd8] sm:$0xff]
    %v280 = vld [vmem:[#allocation10 + $0xe0] sm:$0xff]
    %v281 = vld [vmem:[#allocation10 + $0xe8] sm:$0xff]
    %v282 = vld [vmem:[#allocation10 + $0xf0] sm:$0xff]
    %v283 = vld [vmem:[#allocation10 + $0xf8] sm:$0xff]
    %v284 = vld [vmem:[#allocation10 + $0x100] sm:$0xff]
    %v285 = vld [vmem:[#allocation10 + $0x108] sm:$0xff]
    %v286 = vld [vmem:[#allocation10 + $0x110] sm:$0xff]
    %v287 = vld [vmem:[#allocation10 + $0x118] sm:$0xff]
    %v288 = vld [vmem:[#allocation10 + $0x120] sm:$0xff]
    %v289 = vld [vmem:[#allocation10 + $0x128] sm:$0xff]
    %v290 = vld [vmem:[#allocation10 + $0x130] sm:$0xff]
    %v291 = vld [vmem:[#allocation10 + $0x138] sm:$0xff]
    %v292 = vld [vmem:[#allocation10 + $0x140] sm:$0xff]
    %v293 = vld [vmem:[#allocation10 + $0x148] sm:$0xff]
    %v294 = vld [vmem:[#allocation10 + $0x150] sm:$0xff]
    %v295 = vld [vmem:[#allocation10 + $0x158] sm:$0xff]
    %v296 = vld [vmem:[#allocation10 + $0x160] sm:$0xff]
    %v297 = vld [vmem:[#allocation10 + $0x168] sm:$0xff]
    %v298 = vld [vmem:[#allocation10 + $0x170] sm:$0xff]
    %v299 = vld [vmem:[#allocation10 + $0x178] sm:$0xff]
    %v300 = vld [vmem:[#allocation10 + $0x180] sm:$0xff]
    %v301 = vld [vmem:[#allocation10 + $0x188] sm:$0xff]
    %v302 = vld [vmem:[#allocation10 + $0x190] sm:$0xff]
    %v303 = vld [vmem:[#allocation10 + $0x198] sm:$0xff]
    %v304 = vld [vmem:[#allocation10 + $0x1a0] sm:$0xff]
    %v305 = vld [vmem:[#allocation10 + $0x1a8] sm:$0xff]
    %v306 = vld [vmem:[#allocation10 + $0x1b0] sm:$0xff]
    %v307 = vld [vmem:[#allocation10 + $0x1b8] sm:$0xff]
    %v308 = vld [vmem:[#allocation10 + $0x1c0] sm:$0xff]
    %v309 = vld [vmem:[#allocation10 + $0x1c8] sm:$0xff]
    %v310 = vld [vmem:[#allocation10 + $0x1d0] sm:$0xff]
    %v311 = vld [vmem:[#allocation10 + $0x1d8] sm:$0xff]
    %v312 = vld [vmem:[#allocation10 + $0x1e0] sm:$0xff]
    %v313 = vld [vmem:[#allocation10 + $0x1e8] sm:$0xff]
    %v314 = vld [vmem:[#allocation10 + $0x1f0] sm:$0xff]
    %v315 = vld [vmem:[#allocation10 + $0x1f8] sm:$0xff]
    %v316 = vld [vmem:[%s6] sm:$0x3]
    %v318 = vperm.slane %v316, 0
    %v319 = vperm.slane %v316, 1
    %322 = vmatpush.msra.mxu0 %v282
    %323 = vmatpush.msra.mxu0 %v280
    %324 = vmatpush.msra.mxu0 %v278
    %325 = vmatpush.msra.mxu0 %v276
    %326 = vmatpush.msra.mxu0 %v274
    %327 = vmatpush.msra.mxu0 %v272
    %328 = vmatpush.msra.mxu0 %v270
    %329 = vmatpush.msra.mxu0 %v268
    %330 = vmatpush.msra.mxu0 %v266
    %331 = vmatpush.msra.mxu0 %v264
    %332 = vmatpush.msra.mxu0 %v262
    %333 = vmatpush.msra.mxu0 %v260
    %334 = vmatpush.msra.mxu0 %v258
    %335 = vmatpush.msra.mxu0 %v256
    %336 = vmatpush.msra.mxu0 %v254
    %337 = vmatpush.msra.mxu0 %v252
    %338 = vmatmul.f32.gmra.mxu0 %v248
    %v339 = vpop.f32.mrf.mxu0
    %v340 = vadd.f32 %v318, %v339
    %341 = vmatmul.f32.gmra.mxu0 %v250
    %v342 = vpop.f32.mrf.mxu0
    %v343 = vadd.f32 %v318, %v342
    %344 = vdwg.mxu0
    %345 = vmatpush.msra.mxu0 %v314
    %346 = vmatpush.msra.mxu0 %v312
    %347 = vmatpush.msra.mxu0 %v310
    %348 = vmatpush.msra.mxu0 %v308
    %349 = vmatpush.msra.mxu0 %v306
    %350 = vmatpush.msra.mxu0 %v304
    %351 = vmatpush.msra.mxu0 %v302
    %352 = vmatpush.msra.mxu0 %v300
    %353 = vmatpush.msra.mxu0 %v298
    %354 = vmatpush.msra.mxu0 %v296
    %355 = vmatpush.msra.mxu0 %v294
    %356 = vmatpush.msra.mxu0 %v292
    %357 = vmatpush.msra.mxu0 %v290
    %358 = vmatpush.msra.mxu0 %v288
    %359 = vmatpush.msra.mxu0 %v286
    %360 = vmatpush.msra.mxu0 %v284
    %361 = vmatmul.f32.gmra.mxu0 %v249
    %v362 = vpop.f32.mrf.mxu0
    %v363 = vadd.f32 %v340, %v362
    %364 = vmatmul.f32.gmra.mxu0 %v251
    %v365 = vpop.f32.mrf.mxu0
    %v366 = vadd.f32 %v343, %v365
    %367 = vdwg.mxu0
    %368 = vmatpush.msra.mxu0 %v283
    %369 = vmatpush.msra.mxu0 %v281
    %370 = vmatpush.msra.mxu0 %v279
    %371 = vmatpush.msra.mxu0 %v277
    %372 = vmatpush.msra.mxu0 %v275
    %373 = vmatpush.msra.mxu0 %v273
    %374 = vmatpush.msra.mxu0 %v271
    %375 = vmatpush.msra.mxu0 %v269
    %376 = vmatpush.msra.mxu0 %v267
    %377 = vmatpush.msra.mxu0 %v265
    %378 = vmatpush.msra.mxu0 %v263
    %379 = vmatpush.msra.mxu0 %v261
    %380 = vmatpush.msra.mxu0 %v259
    %381 = vmatpush.msra.mxu0 %v257
    %382 = vmatpush.msra.mxu0 %v255
    %383 = vmatpush.msra.mxu0 %v253
    %384 = vmatmul.f32.gmra.mxu0 %v248
    %v385 = vpop.f32.mrf.mxu0
    %v386 = vadd.f32 %v319, %v385
    %387 = vmatmul.f32.gmra.mxu0 %v250
    %v388 = vpop.f32.mrf.mxu0
    %v389 = vadd.f32 %v319, %v388
    %390 = vdwg.mxu0
    %391 = vmatpush.msra.mxu0 %v315
    %392 = vmatpush.msra.mxu0 %v313
    %393 = vmatpush.msra.mxu0 %v311
    %394 = vmatpush.msra.mxu0 %v309
    %395 = vmatpush.msra.mxu0 %v307
    %396 = vmatpush.msra.mxu0 %v305
    %397 = vmatpush.msra.mxu0 %v303
    %398 = vmatpush.msra.mxu0 %v301
    %399 = vmatpush.msra.mxu0 %v299
    %400 = vmatpush.msra.mxu0 %v297
    %401 = vmatpush.msra.mxu0 %v295
    %402 = vmatpush.msra.mxu0 %v293
    %403 = vmatpush.msra.mxu0 %v291
    %404 = vmatpush.msra.mxu0 %v289
    %405 = vmatpush.msra.mxu0 %v287
    %406 = vmatpush.msra.mxu0 %v285
    %407 = vmatmul.f32.gmra.mxu0 %v249
    %v408 = vpop.f32.mrf.mxu0
    %v409 = vadd.f32 %v386, %v408
    %410 = vmatmul.f32.gmra.mxu0 %v251
    %v411 = vpop.f32.mrf.mxu0
    %v412 = vadd.f32 %v389, %v411
    %413 = vdwg.mxu0
    %vm414 = vcmp.gt.f32.partialorder %v363, 0.0
    %vm415 = vcmp.gt.f32.partialorder %v409, 0.0
    %vm416 = vcmp.gt.f32.partialorder %v366, 0.0
    %vm417 = vcmp.gt.f32.partialorder %v412, 0.0
    %v418 = vmul.f32 %v363, 0.01
    %v419 = vmul.f32 %v409, 0.01
    %v420 = vmul.f32 %v366, 0.01
    %v421 = vmul.f32 %v412, 0.01
    %v422 = vsel %vm414, %v363, %v418
    %v423 = vsel %vm415, %v409, %v419
    %v424 = vsel %vm416, %v366, %v420
    %v425 = vsel %vm417, %v412, %v421
    %v426 = vld [vmem:[%s7] sm:$0x3]
    %v428 = vperm.slane %v426, 0
    %v429 = vperm.slane %v426, 1
    %v432 = vmul.f32 %v422, %v428
    %v433 = vmul.f32 %v423, %v429
    %v434 = vmul.f32 %v424, %v428
    %v435 = vmul.f32 %v425, %v429
    %v436 = vadd.f32 %v432, %v433
    %437 = vadd.xlane.f32.xlu0 %v436
    %v438 = vpop.xlane.xlu0 %437
    %v439 = vadd.f32 %v434, %v435
    %440 = vadd.xlane.f32.xlu0 %v439
    %v441 = vpop.xlane.xlu0 %440
    %v442 = vld [vmem:[#allocation2] sm:$0x1]
    %v444 = vperm.slane %v442, 0
    %v446 = vadd.f32 %v438, %v444
    %v447 = vadd.f32 %v441, %v444
    %v448 = vxor.u32 %v446, 2147483648
    %v449 = vxor.u32 %v447, 2147483648
    %v450 = vmul.f32 %v448, 1.442695
    %v451 = vpow.pop %v450
    %v452 = vmul.f32 %v449, 1.442695
    %v453 = vpow.pop %v452
    %v454 = vadd.f32 %v451, 1.0
    %v455 = vadd.f32 %v453, 1.0
    %v456 = vrcp.pop %v454
    %v457 = vmul.f32 %v454, %v456
    %v458 = vsub.f32 1.0, %v457
    %v459 = vmul.f32 %v456, %v458
    %v460 = vadd.f32 %v456, %v459
    %vm461 = vweird.f32 %v454
    %vm462 = vweird.f32 %v456
    %vm463 = vmor %vm461, %vm462
    %v464 = vsel %vm463, %v456, %v460
    %v465 = vand.u32 2147483647, %v454
    %vm466 = vcmp.eq.f32.partialorder %v465, 8.507059e+37
    %v467 = vand.u32 %v454, 2147483648
    %v468 = vor.u32 1.1754944e-38, %v467
    %v469 = vsel %vm466, %v468, %v464
    %v470 = vmul.f32 1.0, %v469
    %v471 = vrcp.pop %v455
    %v472 = vmul.f32 %v455, %v471
    %v473 = vsub.f32 1.0, %v472
    %v474 = vmul.f32 %v471, %v473
    %v475 = vadd.f32 %v471, %v474
    %vm476 = vweird.f32 %v455
    %vm477 = vweird.f32 %v471
    %vm478 = vmor %vm476, %vm477
    %v479 = vsel %vm478, %v471, %v475
    %v480 = vand.u32 2147483647, %v455
    %vm481 = vcmp.eq.f32.partialorder %v480, 8.507059e+37
    %v482 = vand.u32 %v455, 2147483648
    %v483 = vor.u32 1.1754944e-38, %v482
    %v484 = vsel %vm481, %v483, %v479
    %v485 = vmul.f32 1.0, %v484
    %vm486 = vcmask 7168
    %487 = vst.msk [vmem:[%s9] sm:$0xff] %vm486, %v470
    %488 = vst.msk [vmem:[%s9 + $0x8] sm:$0xff] %vm486, %v485
    // Predicated region
    $region58: #{tpu_custom_call.1} parent=1 // pred_check
      _
    $region59: #{tpu_custom_call.1} parent=1 // pred_check_branch
      %490 = sbr.rel (0) target = $region61
    $region60: #{tpu_custom_call.1} parent=1 // pred_region
      _
    $region61: #{tpu_custom_call.1} parent=1 // pred_fallthru
      _
    // Predicated region
    $region62: #{tpu_custom_call.1} parent=1 // pred_check
      _
    $region63: #{tpu_custom_call.1} parent=1 // pred_check_branch
      %492 = sbr.rel (0) target = $region65
    $region64: #{tpu_custom_call.1} parent=1 // pred_region
      _
    $region65: #{tpu_custom_call.1} parent=1 // pred_fallthru
      _
    %493 = vsyncpa [#allocation4], 1
    %494 = vsyncpa [#allocation6], 1
    %495 = vsyncpa [#allocation9], 1

</llo_original>
